<compile_context>
chip_gen: v7x
topology: tpu7x:2x2x1
jax: 0.10.0
libtpu: 0.0.40
codegen_flags: <defaults>
</compile_context>

<pallas_src>
import numpy as np
import jax
import jax.numpy as jnp
from jax.experimental import pallas as pl
from jax.experimental.pallas import tpu as pltpu


def _round_up(a, b):
    return pl.cdiv(a, b) * b


# --------------------------------------------------------------------------
# Pallas kernel: one (row-tile, hidden-chunk) per grid step
# --------------------------------------------------------------------------
def ffn_kernel(x_ref, w_in_ref, b_in_ref, w_out_ref, b_out_ref, o_ref, acc_ref):
    """
    x_ref     : [tile, D]   bf16 input rows (batch*seq flattened), resident across h axis
    w_in_ref  : [2, D, hb]  bf16, stacked gate/value input-projection weight chunk
    b_in_ref  : [2, 1, hb]  fp32, stacked gate/value bias chunk
    w_out_ref : [hb, D]     bf16, output-projection weight chunk (w2^T rows)
    b_out_ref : [1, D]      fp32
    o_ref     : [tile, D]   output rows (written on the last h step)
    acc_ref   : [tile, D]   fp32 VMEM accumulator, persists across the h axis
    """
    j = pl.program_id(1)

    @pl.when(j == 0)
    def _init():
        acc_ref[...] = jnp.zeros_like(acc_ref)

    x = x_ref[...]                                                  # bf16 [tile, D]

    # Gate / value projections for this hidden chunk (fp32 accumulation on the MXU).
    gate = jnp.dot(x, w_in_ref[0], preferred_element_type=jnp.float32) + b_in_ref[0]
    val = jnp.dot(x, w_in_ref[1], preferred_element_type=jnp.float32) + b_in_ref[1]

    # SiLU(gate) * val.  exp -> EUP; approx reciprocal also -> EUP (divide off the VALU).
    sig = pl.reciprocal(1.0 + jnp.exp(-gate), approx=True)
    act = gate * sig * val                                          # fp32 [tile, hb]

    # Partial output projection for this hidden chunk; accumulate in fp32.
    acc_ref[...] += jnp.dot(act.astype(jnp.bfloat16), w_out_ref[...],
                            preferred_element_type=jnp.float32)

    @pl.when(j == pl.num_programs(1) - 1)
    def _finalize():
        # nn.Dropout: identity for p=0.0 / eval.
        # TODO(synk): training-mode dropout (p > 0) would build a keep-mask in-kernel with
        # pltpu.prng_seed + pltpu.prng_random_bits.
        o_ref[...] = (acc_ref[...] + b_out_ref[...]).astype(o_ref.dtype)


# --------------------------------------------------------------------------
# One-time parameter prep (hoisted out of the per-call path)
# --------------------------------------------------------------------------
def prepare_ffn_params(w1, b1, wv, bv, w2, b2):
    """Torch layout: w1 / wv are [H, D], w2 is [D, H].  Call once at load time."""
    H, D = w1.shape
    w_in = jnp.stack([w1.T, wv.T], axis=0).astype(jnp.bfloat16)        # [2, D, H]
    b_in = jnp.stack([b1, bv], axis=0).reshape(2, 1, H).astype(jnp.float32)
    w_out = jnp.asarray(w2).T.astype(jnp.bfloat16)                     # [H, D]
    b_out = jnp.asarray(b2).reshape(1, D).astype(jnp.float32)
    return w_in, b_in, w_out, b_out


def _pick_h_block(H, h_block):
    if h_block is None:
        for cand in (512, 256, 128):
            if H % cand == 0:
                return cand
        return H                      # small / odd H: single chunk (block == full dim)
    assert H % h_block == 0 and (h_block % 128 == 0 or h_block == H)
    return h_block


# --------------------------------------------------------------------------
# Wrapper
# --------------------------------------------------------------------------
def ffn_forward_pallas(x, params, *, block_rows=256, h_block=None,
                       out_dtype=jnp.bfloat16):
    """x: [B, L, D]; params from prepare_ffn_params().  Returns [B, L, D] in out_dtype
    (pass out_dtype=jnp.float32 if downstream requires fp32 activations)."""
    w_in, b_in, w_out, b_out = params
    B, L, D = x.shape
    H = w_out.shape[0]
    hb = _pick_h_block(H, h_block)

    # Lane-dense [N, D] activation slab; row tile multiple of 16 (bf16 sublane packing).
    N = B * L
    tile = _round_up(max(16, min(block_rows, _round_up(N, 16))), 16)
    Np = _round_up(N, tile)
    xf = x.reshape(N, D).astype(jnp.bfloat16)          # bf16 over HBM: halves DMA traffic
    if Np != N:
        xf = jnp.pad(xf, ((0, Np - N), (0, 0)))
    grid = (Np // tile, H // hb)

    # Explicit scoped-VMEM budget: double-buffered blocks + fp32 accumulator
    # + fp32 intermediates, with ~25% headroom.
    out_bpe = jnp.dtype(out_dtype).itemsize
    block_bytes = (tile * D * 2              # x tile (bf16)
                   + 2 * D * hb * 2          # w_in chunk (bf16)
                   + 2 * hb * 4              # b_in chunk (fp32)
                   + hb * D * 2              # w_out chunk (bf16)
                   + D * 4                   # b_out (fp32)
                   + tile * D * out_bpe)     # out tile
    est = 2 * block_bytes + tile * D * 4 + 4 * tile * hb * 4
    vmem_limit = int(min(max(est * 1.25, 32 * 1024 * 1024), 100 * 1024 * 1024))

    flops = 6 * Np * D * H                   # gate + value + output projections
    bytes_accessed = (xf.size * 2 + Np * D * out_bpe
                      + w_in.size * 2 + w_out.size * 2
                      + b_in.size * 4 + b_out.size * 4)
    cost = pl.CostEstimate(flops=flops, transcendentals=Np * H,
                           bytes_accessed=bytes_accessed)

    out = pl.pallas_call(
        ffn_kernel,
        out_shape=jax.ShapeDtypeStruct((Np, D), out_dtype),
        grid=grid,
        in_specs=[
            pl.BlockSpec((tile, D), lambda i, j: (i, 0)),        # x rows (resident over j)
            pl.BlockSpec((2, D, hb), lambda i, j: (0, 0, j)),    # gate/value weight chunk
            pl.BlockSpec((2, 1, hb), lambda i, j: (0, 0, j)),    # gate/value bias chunk
            pl.BlockSpec((hb, D), lambda i, j: (j, 0)),          # out-proj weight chunk
            pl.BlockSpec((1, D), lambda i, j: (0, 0)),           # out-proj bias
        ],
        out_specs=pl.BlockSpec((tile, D), lambda i, j: (i, 0)),  # resident across j
        scratch_shapes=[pltpu.VMEM((tile, D), jnp.float32)],     # fp32 output accumulator
        compiler_params=pltpu.CompilerParams(
            dimension_semantics=("parallel", "arbitrary"),       # rows: megacore; H: reduction
            vmem_limit_bytes=vmem_limit,
        ),
        cost_estimate=cost,
    )(xf, w_in, b_in, w_out, b_out)

    return out[:N].reshape(B, L, D)


# --------------------------------------------------------------------------
# Pure-JAX reference (faithful to the PyTorch FFN/SwiGLU forward, fp32)
# --------------------------------------------------------------------------
def reference_ffn(x, w1, b1, wv, bv, w2, b2):
    g = jnp.einsum("bld,hd->blh", x, w1) + b1
    v = jnp.einsum("bld,hd->blh", x, wv) + bv
    h = (g * jax.nn.sigmoid(g)) * v
    return jnp.einsum("blh,dh->bld", h, w2) + b2   # dropout(p=0.0) == identity


# --------------------------------------------------------------------------
if __name__ == "__main__":
    # Small config consistent with the module: n_embd=32, scale=6, bias=True
    # -> h_dim = scale * n_embd * 2 // 3 = 128
    B, L = 2, 8
    n_embd, scale = 32, 6
    h_dim = scale * n_embd * 2 // 3          # 128

    key = jax.random.PRNGKey(0)
    ks = jax.random.split(key, 7)
    w1 = 0.1 * jax.random.normal(ks[0], (h_dim, n_embd), jnp.float32)
    b1 = 0.1 * jax.random.normal(ks[1], (h_dim,), jnp.float32)
    wv = 0.1 * jax.random.normal(ks[2], (h_dim, n_embd), jnp.float32)
    bv = 0.1 * jax.random.normal(ks[3], (h_dim,), jnp.float32)
    w2 = 0.1 * jax.random.normal(ks[4], (n_embd, h_dim), jnp.float32)
    b2 = 0.1 * jax.random.normal(ks[5], (n_embd,), jnp.float32)
    x = jax.random.normal(ks[6], (B, L, n_embd), jnp.float32)

    # Weight prep done once (hoisted out of the forward path).
    params = prepare_ffn_params(w1, b1, wv, bv, w2, b2)
    params = jax.block_until_ready(params)

    out = ffn_forward_pallas(x, params)
    out = jax.block_until_ready(out)

    ref = jax.block_until_ready(reference_ffn(x, w1, b1, wv, bv, w2, b2))

    out_np = np.asarray(out).astype(np.float32)
    ref_np = np.asarray(ref)
    assert out_np.shape == (B, L, n_embd)
    assert np.all(np.isfinite(out_np))
    max_err = float(np.max(np.abs(out_np - ref_np)))
    # Precision contract: bf16 operands on the MXU + bf16 activation I/O, fp32 accumulation.
    if not np.allclose(out_np, ref_np, rtol=2e-2, atol=2e-2):
        raise SystemExit(f"mismatch vs reference, max abs err = {max_err}")
    print("KERNEL_OK")
</pallas_src>

<mosaic_0001>
module attributes {stable_mosaic.version = 11 : i64} {
  func.func @ffn_kernel(%arg0: i32, %arg1: i32, %arg2: memref<16x32xbf16, #tpu.memory_space<vmem>>, %arg3: memref<2x32x128xbf16, #tpu.memory_space<vmem>>, %arg4: memref<2x1x128xf32, #tpu.memory_space<vmem>>, %arg5: memref<128x32xbf16, #tpu.memory_space<vmem>>, %arg6: memref<1x32xf32, #tpu.memory_space<vmem>>, %arg7: memref<16x32xbf16, #tpu.memory_space<vmem>>, %arg8: memref<16x32xf32, #tpu.memory_space<vmem>>) attributes {dimension_semantics = [#tpu.dimension_semantics<parallel>, #tpu.dimension_semantics<arbitrary>], iteration_bounds = array<i64: 1, 1>, scalar_prefetch = 0 : i64, scratch_operands = 1 : i64, tpu.core_type = #tpu.core_type<tc>, window_params = [{transform_indices = @transform_0, window_bounds = array<i64: 16, 32>}, {transform_indices = @transform_1, window_bounds = array<i64: 2, 32, 128>}, {transform_indices = @transform_2, window_bounds = array<i64: 2, 1, 128>}, {transform_indices = @transform_3, window_bounds = array<i64: 128, 32>}, {pipeline_mode = #tpu.pipeline_mode<synchronous>, transform_indices = @transform_4, window_bounds = array<i64: 1, 32>}, {transform_indices = @transform_5, window_bounds = array<i64: 16, 32>}]} {
    %c0_i32 = arith.constant 0 : i32
    %0 = arith.cmpi eq, %arg1, %c0_i32 : i32
    %1 = arith.extui %0 : i1 to i32
    %c0_i32_0 = arith.constant 0 : i32
    %2 = arith.cmpi ne, %1, %c0_i32_0 : i32
    scf.if %2 {
      %cst_25 = arith.constant 0.000000e+00 : f32
      %35 = vector.broadcast %cst_25 : f32 to vector<16x32xf32>
      %c0_26 = arith.constant 0 : index
      %c0_27 = arith.constant 0 : index
      %36 = vector.load %arg8[%c0_26, %c0_27] : memref<16x32xf32, #tpu.memory_space<vmem>>, vector<16x32xf32>
      tpu.vector_store %arg8[%c0_26, %c0_27], %35 {strides = array<i32>} : memref<16x32xf32, #tpu.memory_space<vmem>>, vector<16x32xf32>,
    } else {
    }
    %c0 = arith.constant 0 : index
    %c0_1 = arith.constant 0 : index
    %3 = vector.load %arg2[%c0, %c0_1] : memref<16x32xbf16, #tpu.memory_space<vmem>>, vector<16x32xbf16>
    %c0_2 = arith.constant 0 : index
    %c0_3 = arith.constant 0 : index
    %c0_4 = arith.constant 0 : index
    %4 = vector.load %arg3[%c0_2, %c0_3, %c0_4] : memref<2x32x128xbf16, #tpu.memory_space<vmem>>, vector<1x32x128xbf16>
    %5 = vector.shape_cast %4 : vector<1x32x128xbf16> to vector<32x128xbf16>
    %cst = arith.constant dense<0.000000e+00> : vector<16x128xf32>
    %6 = tpu.matmul %3, %5, %cst {dimension_numbers = #tpu.dot_dimension_numbers<[1], [0], [0], [1], [0, 0, 1, 1], [], []>} : vector<16x32xbf16>, vector<32x128xbf16>, vector<16x128xf32> -> vector<16x128xf32>
    %c0_5 = arith.constant 0 : index
    %c0_6 = arith.constant 0 : index
    %c0_7 = arith.constant 0 : index
    %7 = vector.load %arg4[%c0_5, %c0_6, %c0_7] : memref<2x1x128xf32, #tpu.memory_space<vmem>>, vector<1x1x128xf32>
    %8 = vector.shape_cast %7 : vector<1x1x128xf32> to vector<1x128xf32>
    %9 = vector.broadcast %8 : vector<1x128xf32> to vector<16x128xf32>
    %10 = arith.addf %6, %9 : vector<16x128xf32>
    %c1 = arith.constant 1 : index
    %c0_8 = arith.constant 0 : index
    %c0_9 = arith.constant 0 : index
    %11 = vector.load %arg3[%c1, %c0_8, %c0_9] : memref<2x32x128xbf16, #tpu.memory_space<vmem>>, vector<1x32x128xbf16>
    %12 = vector.shape_cast %11 : vector<1x32x128xbf16> to vector<32x128xbf16>
    %cst_10 = arith.constant dense<0.000000e+00> : vector<16x128xf32>
    %13 = tpu.matmul %3, %12, %cst_10 {dimension_numbers = #tpu.dot_dimension_numbers<[1], [0], [0], [1], [0, 0, 1, 1], [], []>} : vector<16x32xbf16>, vector<32x128xbf16>, vector<16x128xf32> -> vector<16x128xf32>
    %c1_11 = arith.constant 1 : index
    %c0_12 = arith.constant 0 : index
    %c0_13 = arith.constant 0 : index
    %14 = vector.load %arg4[%c1_11, %c0_12, %c0_13] : memref<2x1x128xf32, #tpu.memory_space<vmem>>, vector<1x1x128xf32>
    %15 = vector.shape_cast %14 : vector<1x1x128xf32> to vector<1x128xf32>
    %16 = vector.broadcast %15 : vector<1x128xf32> to vector<16x128xf32>
    %17 = arith.addf %13, %16 : vector<16x128xf32>
    %cst_14 = arith.constant 0.000000e+00 : f32
    %18 = vector.broadcast %cst_14 : f32 to vector<16x128xf32>
    %19 = arith.subf %18, %10 : vector<16x128xf32>
    %20 = math.exp %19 : vector<16x128xf32>
    %cst_15 = arith.constant 1.000000e+00 : f32
    %21 = vector.broadcast %cst_15 : f32 to vector<16x128xf32>
    %22 = arith.addf %21, %20 : vector<16x128xf32>
    %23 = tpu.reciprocal %22 {approx = true} : vector<16x128xf32> -> vector<16x128xf32>
    %24 = arith.mulf %10, %23 : vector<16x128xf32>
    %25 = arith.mulf %24, %17 : vector<16x128xf32>
    %c0_16 = arith.constant 0 : index
    %c0_17 = arith.constant 0 : index
    %26 = vector.load %arg8[%c0_16, %c0_17] : memref<16x32xf32, #tpu.memory_space<vmem>>, vector<16x32xf32>
    %27 = arith.truncf %25 : vector<16x128xf32> to vector<16x128xbf16>
    %c0_18 = arith.constant 0 : index
    %c0_19 = arith.constant 0 : index
    %28 = vector.load %arg5[%c0_18, %c0_19] : memref<128x32xbf16, #tpu.memory_space<vmem>>, vector<128x32xbf16>
    %cst_20 = arith.constant dense<0.000000e+00> : vector<16x32xf32>
    %29 = tpu.matmul %27, %28, %cst_20 {dimension_numbers = #tpu.dot_dimension_numbers<[1], [0], [0], [1], [0, 0, 1, 1], [], []>} : vector<16x128xbf16>, vector<128x32xbf16>, vector<16x32xf32> -> vector<16x32xf32>
    %30 = arith.addf %26, %29 : vector<16x32xf32>
    %c0_21 = arith.constant 0 : index
    %c0_22 = arith.constant 0 : index
    %31 = vector.load %arg8[%c0_21, %c0_22] : memref<16x32xf32, #tpu.memory_space<vmem>>, vector<16x32xf32>
    tpu.vector_store %arg8[%c0_21, %c0_22], %30 {strides = array<i32>} : memref<16x32xf32, #tpu.memory_space<vmem>>, vector<16x32xf32>,
    %c0_i32_23 = arith.constant 0 : i32
    %32 = arith.cmpi eq, %arg1, %c0_i32_23 : i32
    %33 = arith.extui %32 : i1 to i32
    %c0_i32_24 = arith.constant 0 : i32
    %34 = arith.cmpi ne, %33, %c0_i32_24 : i32
    scf.if %34 {
      %c0_25 = arith.constant 0 : index
      %c0_26 = arith.constant 0 : index
      %35 = vector.load %arg8[%c0_25, %c0_26] : memref<16x32xf32, #tpu.memory_space<vmem>>, vector<16x32xf32>
      %c0_27 = arith.constant 0 : index
      %c0_28 = arith.constant 0 : index
      %36 = vector.load %arg6[%c0_27, %c0_28] : memref<1x32xf32, #tpu.memory_space<vmem>>, vector<1x32xf32>
      %37 = vector.broadcast %36 : vector<1x32xf32> to vector<16x32xf32>
      %38 = arith.addf %35, %37 : vector<16x32xf32>
      %39 = arith.truncf %38 : vector<16x32xf32> to vector<16x32xbf16>
      %c0_29 = arith.constant 0 : index
      %c0_30 = arith.constant 0 : index
      %40 = vector.load %arg7[%c0_29, %c0_30] : memref<16x32xbf16, #tpu.memory_space<vmem>>, vector<16x32xbf16>
      tpu.vector_store %arg7[%c0_29, %c0_30], %39 {strides = array<i32>} : memref<16x32xbf16, #tpu.memory_space<vmem>>, vector<16x32xbf16>,
    } else {
    }
    return
  }
  func.func @transform_0(%arg0: i32, %arg1: i32) -> (i32, i32) {
    %c0_i32 = arith.constant 0 : i32
    %c0_i32_0 = arith.constant 0 : i32
    return %arg0, %c0_i32 : i32, i32
  }
  func.func @transform_1(%arg0: i32, %arg1: i32) -> (i32, i32, i32) {
    %c0_i32 = arith.constant 0 : i32
    %c0_i32_0 = arith.constant 0 : i32
    %c0_i32_1 = arith.constant 0 : i32
    return %c0_i32, %c0_i32_0, %arg1 : i32, i32, i32
  }
  func.func @transform_2(%arg0: i32, %arg1: i32) -> (i32, i32, i32) {
    %c0_i32 = arith.constant 0 : i32
    %c0_i32_0 = arith.constant 0 : i32
    %c0_i32_1 = arith.constant 0 : i32
    return %c0_i32, %c0_i32_0, %arg1 : i32, i32, i32
  }
  func.func @transform_3(%arg0: i32, %arg1: i32) -> (i32, i32) {
    %c0_i32 = arith.constant 0 : i32
    %c0_i32_0 = arith.constant 0 : i32
    return %arg1, %c0_i32 : i32, i32
  }
  func.func @transform_4(%arg0: i32, %arg1: i32) -> (i32, i32) {
    %c0_i32 = arith.constant 0 : i32
    %c0_i32_0 = arith.constant 0 : i32
    %c0_i32_1 = arith.constant 0 : i32
    return %c0_i32, %c0_i32_0 : i32, i32
  }
  func.func @transform_5(%arg0: i32, %arg1: i32) -> (i32, i32) {
    %c0_i32 = arith.constant 0 : i32
    %c0_i32_0 = arith.constant 0 : i32
    return %arg0, %c0_i32 : i32, i32
  }
}

</mosaic_0001>

<llo_original>
// kernel: tpu_custom_call.1
$region0: #{tpu_custom_call.1}
  #allocation0 [shape = 'u32[]', space=smem, size = 0x4, offset = 0x4, fixed_abs, tag = 'smem constant byte address 0x4 - core index']
  #allocation1 [shape = 'u32[144,128]{1,0:T(1,128)}', space=vmem, size = 0x12000, scoped, tag = 'internal scratch']
  #allocation2 [shape = 'f32[16,32]{1,0:T(8,128)}', space=vmem, size = 0x2000, scoped, tag = 'scratch operand']
  %s0 = inlined_call_operand.vmem [shape: bf16[16,32], index: 0, kind: input, shape index: {}]
  %s1 = inlined_call_operand.vmem [shape: bf16[2,32,128], index: 1, kind: input, shape index: {}]
  %s2 = inlined_call_operand.vmem [shape: f32[2,1,128], index: 2, kind: input, shape index: {}]
  %s3 = inlined_call_operand.vmem [shape: bf16[128,32], index: 3, kind: input, shape index: {}]
  %s4 = inlined_call_operand.vmem [shape: f32[1,32], index: 4, kind: input, shape index: {}]
  %s5 = inlined_call_operand.hbm [shape: bf16[16,32], index: 5, kind: output, shape index: {}]
  %s6 = sld [smem:[#allocation0]]
  $region38: #{tpu_custom_call.1} parent=0
    _
  %s8 = ssub.s32 1, %s6
  %s9 = scalar_select 0, %s8, %s6
  $region1: #{tpu_custom_call.1} parent=0
    #allocation3 [shape = 'u8[4096]{0}', space=vmem, size = 0x1000, scoped, tag = 'output window, operand 0, single buffered']
    #allocation4 [shape = 's32[1]{0}', space=sflag, size = 0x4, scoped, tag = 'scoped memory for tpu_custom_call.1']
    %10 = vsyncpa [#allocation4], 0
    // Predicated region
    $region2: #{tpu_custom_call.1} parent=1 // pred_check
      _
    $region3: #{tpu_custom_call.1} parent=1 // pred_check_branch
      %12 = sbr.rel (0) target = $region5
    $region4: #{tpu_custom_call.1} parent=1 // pred_region
      _
    $region5: #{tpu_custom_call.1} parent=1 // pred_fallthru
      _
    // Predicated region
    $region6: #{tpu_custom_call.1} parent=1 // pred_check
      _
    $region7: #{tpu_custom_call.1} parent=1 // pred_check_branch
      %14 = sbr.rel (0) target = $region9
    $region8: #{tpu_custom_call.1} parent=1 // pred_region
      _
    $region9: #{tpu_custom_call.1} parent=1 // pred_fallthru
      _
    // Predicated region
    $region10: #{tpu_custom_call.1} parent=1 // pred_check
      _
    $region11: #{tpu_custom_call.1} parent=1 // pred_check_branch
      %16 = sbr.rel (0) target = $region13
    $region12: #{tpu_custom_call.1} parent=1 // pred_region
      _
    $region13: #{tpu_custom_call.1} parent=1 // pred_fallthru
      _
    // Predicated region
    $region14: #{tpu_custom_call.1} parent=1 // pred_check
      _
    $region15: #{tpu_custom_call.1} parent=1 // pred_check_branch
      %18 = sbr.rel (0) target = $region17
    $region16: #{tpu_custom_call.1} parent=1 // pred_region
      _
    $region17: #{tpu_custom_call.1} parent=1 // pred_fallthru
      _
    // Predicated region
    $region18: #{tpu_custom_call.1} parent=1 // pred_check
      _
    $region19: #{tpu_custom_call.1} parent=1 // pred_check_branch
      %20 = sbr.rel (0) target = $region21
    $region20: #{tpu_custom_call.1} parent=1 // pred_region
      _
    $region21: #{tpu_custom_call.1} parent=1 // pred_fallthru
      _
    %p22 = scmp.eq.s32.totalorder 0, 0
    // Predicated region
    $region22: #{tpu_custom_call.1} parent=1 // pred_check
      %p23 = pneg %p22
    $region23: #{tpu_custom_call.1} parent=1 // pred_check_branch
      %25 = sbr.rel (%p23) target = $region25
    $region24: #{tpu_custom_call.1} parent=1 // pred_region
      %vm26 = vcmask 261120
      %27 = vst.msk [vmem:[#allocation2] sm:$0xff] %vm26, 0.0
      %28 = vst.msk [vmem:[#allocation2 + $0x8] sm:$0xff] %vm26, 0.0
    $region25: #{tpu_custom_call.1} parent=1 // pred_fallthru
      _
    %v29 = vld [vmem:[%s0] sm:$0xf]
    %v30 = vld [vmem:[%s0 + $0x4] sm:$0xf]
    %v31 = vld [vmem:[%s1] sm:$0xf]
    %v32 = vld [vmem:[%s1 + $0x4] sm:$0xf]
    %v33 = vld [vmem:[%s1 + $0x8] sm:$0xf]
    %v34 = vld [vmem:[%s1 + $0xc] sm:$0xf]
    %v35 = vld [vmem:[%s2] sm:$0x1]
    %v37 = vlaneseq
    %v38 = vshrl.u32 %v37, 7
    %v39 = vsub.s32 0, %v38
    %v40 = vrot.slane %v35, %v39
    %v44 = vunpack.c.l.b16 %v29
    %v45 = vunpack.c.l.b16 %v30
    %v46 = vpack.c.b16 %v45, %v44
    %v51 = vunpack.c.l.b16 %v31
    %v52 = vunpack.c.l.b16 %v32
    %v53 = vunpack.c.l.b16 %v33
    %v54 = vunpack.c.l.b16 %v34
    %v55 = vpack.c.b16 %v52, %v51
    %v56 = vpack.c.b16 %v54, %v53
    %vm59 = vcmask 261120
    %v61 = vsel %vm59, %v46, 0
    %63 = vmatprep.subr.bf16.mxu0 0
    %64 = vmatpush1.bf16.msra.mxu0 %v55
    %65 = vmatprep.subr.bf16.mxu0 0
    %66 = vmatpush1.bf16.msra.mxu0 %v56
    %67 = vmatprep.subr.bf16.mxu0 0
    %68 = vmatpush1.bf16.msra.mxu0 0
    %69 = vmatprep.subr.bf16.mxu0 0
    %70 = vmatpush1.bf16.msra.mxu0 0
    %71 = vmatprep.subr.bf16.mxu0 0
    %72 = vmatpush1.bf16.msra.mxu0 0
    %73 = vmatprep.subr.bf16.mxu0 0
    %74 = vmatpush1.bf16.msra.mxu0 0
    %75 = vmatprep.subr.bf16.mxu0 0
    %76 = vmatpush1.bf16.msra.mxu0 0
    %77 = vmatprep.subr.bf16.mxu0 0
    %78 = vmatpush1.bf16.msra.mxu0 0
    %79 = vmatprep.subr.bf16.mxu0 0
    %80 = vmatpush1.bf16.msra.mxu0 0
    %81 = vmatprep.subr.bf16.mxu0 0
    %82 = vmatpush1.bf16.msra.mxu0 0
    %83 = vmatprep.subr.bf16.mxu0 0
    %84 = vmatpush1.bf16.msra.mxu0 0
    %85 = vmatprep.subr.bf16.mxu0 0
    %86 = vmatpush1.bf16.msra.mxu0 0
    %87 = vmatprep.subr.bf16.mxu0 0
    %88 = vmatpush1.bf16.msra.mxu0 0
    %89 = vmatprep.subr.bf16.mxu0 0
    %90 = vmatpush1.bf16.msra.mxu0 0
    %91 = vmatprep.subr.bf16.mxu0 0
    %92 = vmatpush1.bf16.msra.mxu0 0
    %93 = vmatprep.subr.bf16.mxu0 0
    %94 = vmatpush1.bf16.msra.mxu0 0
    %95 = vmatprep.mubr.bf16.mxu0 0
    %96 = vmatmul.mubr.bf16.gmra.mrb[0].mxu0 %v61
    %v97 = vpop.f32.mrb[0].mxu0
    %v98 = vadd.f32 %v40, %v97
    %v99 = vpop.f32.mrb[0].mxu0
    %v100 = vpop.f32.mrb[0].mxu0
    %v101 = vadd.f32 %v40, %v100
    %v102 = vpop.f32.mrb[0].mxu0
    %103 = vdwg.mxu0
    %s104 = scalar_lea.vmem %s1, 16
    %v105 = vld [vmem:[%s104] sm:$0xf]
    %v106 = vld [vmem:[%s104 + $0x4] sm:$0xf]
    %v107 = vld [vmem:[%s104 + $0x8] sm:$0xf]
    %v108 = vld [vmem:[%s104 + $0xc] sm:$0xf]
    %s109 = scalar_lea.vmem %s2, 1
    %v110 = vld [vmem:[%s109] sm:$0x1]
    %v112 = vlaneseq
    %v113 = vshrl.u32 %v112, 7
    %v114 = vsub.s32 0, %v113
    %v115 = vrot.slane %v110, %v114
    %v121 = vunpack.c.l.b16 %v105
    %v122 = vunpack.c.l.b16 %v106
    %v123 = vunpack.c.l.b16 %v107
    %v124 = vunpack.c.l.b16 %v108
    %v125 = vpack.c.b16 %v122, %v121
    %v126 = vpack.c.b16 %v124, %v123
    %129 = vmatprep.subr.bf16.mxu0 0
    %130 = vmatpush1.bf16.msra.mxu0 %v125
    %131 = vmatprep.subr.bf16.mxu0 0
    %132 = vmatpush1.bf16.msra.mxu0 %v126
    %133 = vmatprep.subr.bf16.mxu0 0
    %134 = vmatpush1.bf16.msra.mxu0 0
    %135 = vmatprep.subr.bf16.mxu0 0
    %136 = vmatpush1.bf16.msra.mxu0 0
    %137 = vmatprep.subr.bf16.mxu0 0
    %138 = vmatpush1.bf16.msra.mxu0 0
    %139 = vmatprep.subr.bf16.mxu0 0
    %140 = vmatpush1.bf16.msra.mxu0 0
    %141 = vmatprep.subr.bf16.mxu0 0
    %142 = vmatpush1.bf16.msra.mxu0 0
    %143 = vmatprep.subr.bf16.mxu0 0
    %144 = vmatpush1.bf16.msra.mxu0 0
    %145 = vmatprep.subr.bf16.mxu0 0
    %146 = vmatpush1.bf16.msra.mxu0 0
    %147 = vmatprep.subr.bf16.mxu0 0
    %148 = vmatpush1.bf16.msra.mxu0 0
    %149 = vmatprep.subr.bf16.mxu0 0
    %150 = vmatpush1.bf16.msra.mxu0 0
    %151 = vmatprep.subr.bf16.mxu0 0
    %152 = vmatpush1.bf16.msra.mxu0 0
    %153 = vmatprep.subr.bf16.mxu0 0
    %154 = vmatpush1.bf16.msra.mxu0 0
    %155 = vmatprep.subr.bf16.mxu0 0
    %156 = vmatpush1.bf16.msra.mxu0 0
    %157 = vmatprep.subr.bf16.mxu0 0
    %158 = vmatpush1.bf16.msra.mxu0 0
    %159 = vmatprep.subr.bf16.mxu0 0
    %160 = vmatpush1.bf16.msra.mxu0 0
    %161 = vmatprep.mubr.bf16.mxu0 0
    %162 = vmatmul.mubr.bf16.gmra.mrb[0].mxu0 %v61
    %v163 = vpop.f32.mrb[0].mxu0
    %v164 = vadd.f32 %v115, %v163
    %v165 = vpop.f32.mrb[0].mxu0
    %v166 = vpop.f32.mrb[0].mxu0
    %v167 = vadd.f32 %v115, %v166
    %v168 = vpop.f32.mrb[0].mxu0
    %169 = vdwg.mxu0
    %v170 = vsub.f32 0.0, %v98
    %v171 = vsub.f32 0.0, %v101
    %v172 = vmul.f32 %v170, 1.442695
    %v173 = vpow.pop %v172
    %v174 = vmul.f32 %v171, 1.442695
    %v175 = vpow.pop %v174
    %v176 = vadd.f32 %v173, 1.0
    %v177 = vadd.f32 %v175, 1.0
    %v178 = vrcp.pop %v176
    %v179 = vrcp.pop %v177
    %v180 = vmul.f32 %v98, %v178
    %v181 = vmul.f32 %v101, %v179
    %v182 = vmul.f32 %v180, %v164
    %v183 = vmul.f32 %v181, %v167
    %v184 = vld [vmem:[#allocation2] sm:$0xff]
    %v185 = vld [vmem:[#allocation2 + $0x8] sm:$0xff]
    %v186 = vpack.c.bf16 %v183, %v182
    %v187 = vld [vmem:[%s3] sm:$0xf]
    %v188 = vld [vmem:[%s3 + $0x4] sm:$0xf]
    %v189 = vld [vmem:[%s3 + $0x8] sm:$0xf]
    %v190 = vld [vmem:[%s3 + $0xc] sm:$0xf]
    %v191 = vld [vmem:[%s3 + $0x10] sm:$0xf]
    %v192 = vld [vmem:[%s3 + $0x14] sm:$0xf]
    %v193 = vld [vmem:[%s3 + $0x18] sm:$0xf]
    %v194 = vld [vmem:[%s3 + $0x1c] sm:$0xf]
    %v195 = vld [vmem:[%s3 + $0x20] sm:$0xf]
    %v196 = vld [vmem:[%s3 + $0x24] sm:$0xf]
    %v197 = vld [vmem:[%s3 + $0x28] sm:$0xf]
    %v198 = vld [vmem:[%s3 + $0x2c] sm:$0xf]
    %v199 = vld [vmem:[%s3 + $0x30] sm:$0xf]
    %v200 = vld [vmem:[%s3 + $0x34] sm:$0xf]
    %v201 = vld [vmem:[%s3 + $0x38] sm:$0xf]
    %v202 = vld [vmem:[%s3 + $0x3c] sm:$0xf]
    %v219 = vunpack.c.l.b16 %v187
    %v220 = vunpack.c.l.b16 %v188
    %v221 = vunpack.c.l.b16 %v189
    %v222 = vunpack.c.l.b16 %v190
    %v223 = vunpack.c.l.b16 %v191
    %v224 = vunpack.c.l.b16 %v192
    %v225 = vunpack.c.l.b16 %v193
    %v226 = vunpack.c.l.b16 %v194
    %v227 = vunpack.c.l.b16 %v195
    %v228 = vunpack.c.l.b16 %v196
    %v229 = vunpack.c.l.b16 %v197
    %v230 = vunpack.c.l.b16 %v198
    %v231 = vunpack.c.l.b16 %v199
    %v232 = vunpack.c.l.b16 %v200
    %v233 = vunpack.c.l.b16 %v201
    %v234 = vunpack.c.l.b16 %v202
    %v235 = vpack.c.b16 %v220, %v219
    %v236 = vpack.c.b16 %v222, %v221
    %v237 = vpack.c.b16 %v224, %v223
    %v238 = vpack.c.b16 %v226, %v225
    %v239 = vpack.c.b16 %v228, %v227
    %v240 = vpack.c.b16 %v230, %v229
    %v241 = vpack.c.b16 %v232, %v231
    %v242 = vpack.c.b16 %v234, %v233
    %251 = vmatprep.subr.bf16.mxu0 0
    %252 = vmatpush1.bf16.msra.mxu0 %v235
    %253 = vmatprep.subr.bf16.mxu0 0
    %254 = vmatpush1.bf16.msra.mxu0 %v236
    %255 = vmatprep.subr.bf16.mxu0 0
    %256 = vmatpush1.bf16.msra.mxu0 %v237
    %257 = vmatprep.subr.bf16.mxu0 0
    %258 = vmatpush1.bf16.msra.mxu0 %v238
    %259 = vmatprep.subr.bf16.mxu0 0
    %260 = vmatpush1.bf16.msra.mxu0 %v239
    %261 = vmatprep.subr.bf16.mxu0 0
    %262 = vmatpush1.bf16.msra.mxu0 %v240
    %263 = vmatprep.subr.bf16.mxu0 0
    %264 = vmatpush1.bf16.msra.mxu0 %v241
    %265 = vmatprep.subr.bf16.mxu0 0
    %266 = vmatpush1.bf16.msra.mxu0 %v242
    %267 = vmatprep.subr.bf16.mxu0 0
    %268 = vmatpush1.bf16.msra.mxu0 0
    %269 = vmatprep.subr.bf16.mxu0 0
    %270 = vmatpush1.bf16.msra.mxu0 0
    %271 = vmatprep.subr.bf16.mxu0 0
    %272 = vmatpush1.bf16.msra.mxu0 0
    %273 = vmatprep.subr.bf16.mxu0 0
    %274 = vmatpush1.bf16.msra.mxu0 0
    %275 = vmatprep.subr.bf16.mxu0 0
    %276 = vmatpush1.bf16.msra.mxu0 0
    %277 = vmatprep.subr.bf16.mxu0 0
    %278 = vmatpush1.bf16.msra.mxu0 0
    %279 = vmatprep.subr.bf16.mxu0 0
    %280 = vmatpush1.bf16.msra.mxu0 0
    %281 = vmatprep.subr.bf16.mxu0 0
    %282 = vmatpush1.bf16.msra.mxu0 0
    %283 = vmatprep.mubr.bf16.mxu0 0
    %284 = vmatmul.mubr.bf16.gmra.mrb[0].mxu0 %v186
    %v285 = vpop.f32.mrb[0].mxu0
    %v286 = vadd.f32 0.0, %v285
    %v287 = vpop.f32.mrb[0].mxu0
    %v288 = vpop.f32.mrb[0].mxu0
    %v289 = vadd.f32 0.0, %v288
    %v290 = vpop.f32.mrb[0].mxu0
    %291 = vdwg.mxu0
    %v292 = vadd.f32 %v184, %v286
    %v293 = vadd.f32 %v185, %v289
    %294 = vst.msk [vmem:[#allocation2] sm:$0xff] %vm59, %v292
    %295 = vst.msk [vmem:[#allocation2 + $0x8] sm:$0xff] %vm59, %v293
    // Predicated region
    $region26: #{tpu_custom_call.1} parent=1 // pred_check
      %p296 = pneg %p22
    $region27: #{tpu_custom_call.1} parent=1 // pred_check_branch
      %298 = sbr.rel (%p296) target = $region29
    $region28: #{tpu_custom_call.1} parent=1 // pred_region
      %v299 = vld [vmem:[#allocation2] sm:$0xff]
      %v300 = vld [vmem:[#allocation2 + $0x8] sm:$0xff]
      %v301 = vld [vmem:[%s4] sm:$0x1]
      %v303 = vlaneseq
      %v304 = vshrl.u32 %v303, 7
      %v305 = vsub.s32 0, %v304
      %v306 = vrot.slane %v301, %v305
      %v308 = vadd.f32 %v299, %v306
      %v309 = vadd.f32 %v300, %v306
      %v310 = vpack.c.bf16 %v309, %v308
      %v312 = vunpack.c.l.b16 %v310
      %v313 = vunpack.c.h.b16 %v310
      %v314 = vpack.c.b16 %v312, %v312
      %v315 = vpack.c.b16 %v313, %v313
      %vm318 = vcmask 257024
      %319 = vst.msk [vmem:[#allocation3] sm:$0xf] %vm318, %v314
      %320 = vst.msk [vmem:[#allocation3 + $0x4] sm:$0xf] %vm318, %v315
    $region29: #{tpu_custom_call.1} parent=1 // pred_fallthru
      _
    // Predicated region
    $region30: #{tpu_custom_call.1} parent=1 // pred_check
      _
    $region31: #{tpu_custom_call.1} parent=1 // pred_check_branch
      %322 = sbr.rel (0) target = $region33
    $region32: #{tpu_custom_call.1} parent=1 // pred_region
      %s324 = ssub.s32 128, 128
      %325 = vsyncadd [#allocation4], %s324
      %s326 = sshll.u32 [#allocation3], 4
      %s327 = int_to_ptr.vmem [resolvable:$true] %s326
      %332 = dma.vmem_to_hbm [thread:$0]  %s327, 128, %s5, [#allocation4], 64, 64, 4
    $region33: #{tpu_custom_call.1} parent=1 // pred_fallthru
      _
    // Predicated region
    $region34: #{tpu_custom_call.1} parent=1 // pred_check
      _
    $region35: #{tpu_custom_call.1} parent=1 // pred_check_branch
      %334 = sbr.rel (0) target = $region37
    $region36: #{tpu_custom_call.1} parent=1 // pred_region
      %335 = dma.done [#allocation4], 128
    $region37: #{tpu_custom_call.1} parent=1 // pred_fallthru
      _
    %336 = vsyncpa [#allocation4], 1

</llo_original>
